<compile_context>
chip_gen: v5e
topology: v5e:2x2
jax: 0.10.0
libtpu: 0.0.40
codegen_flags: <defaults>
</compile_context>

<pallas_src>
import functools

import jax
import jax.numpy as jnp
from jax import lax
from jax.experimental import pallas as pl
from jax.experimental.pallas import tpu as pltpu


_NEG_BIG = -1e30  # large finite negative instead of -inf (padding/NaN-safe)


def mha_fused_kernel(x_ref, wqkv_ref, wproj_ref, bproj_ref, out_ref,
                     *, num_heads, head_size, scale):
    """Fused causal multi-head self-attention + output projection for one batch item."""
    x = x_ref[0]                      # (T, C), compute dtype (bf16 or f32)
    T = x.shape[0]
    C = num_heads * head_size
    cdt = x.dtype                     # MXU input dtype

    # Q/K/V for all heads in one lane-dense matmul: (T, C) @ (C, 3C) -> (T, 3C), f32 acc.
    qkv = jnp.dot(x, wqkv_ref[...], preferred_element_type=jnp.float32)

    # Fold the attention scale into q once (cheaper than scaling each (T,T) score block),
    # then cast q/k/v to the MXU compute dtype a single time for all heads.
    q = (qkv[:, 0 * C:1 * C] * scale).astype(cdt)
    k = qkv[:, 1 * C:2 * C].astype(cdt)
    v = qkv[:, 2 * C:3 * C].astype(cdt)

    # Additive causal bias, built once and reused for every head (one VPU add per head).
    row = lax.broadcasted_iota(jnp.int32, (T, T), 0)
    col = lax.broadcasted_iota(jnp.int32, (T, T), 1)
    causal_bias = jnp.where(col <= row, 0.0, _NEG_BIG).astype(jnp.float32)

    head_outs = []
    for h in range(num_heads):        # H is tiny; unrolled at trace time
        sl = slice(h * head_size, (h + 1) * head_size)
        qh, kh, vh = q[:, sl], k[:, sl], v[:, sl]

        # q @ k^T without an explicit transpose: contract last dims on the MXU, f32 acc.
        s = lax.dot_general(qh, kh, (((1,), (1,)), ((), ())),
                            preferred_element_type=jnp.float32) + causal_bias

        # Softmax in fp32 on the VPU; divide replaced by EUP approx reciprocal.
        s = s - jnp.max(s, axis=-1, keepdims=True)
        p = jnp.exp(s)
        p = p * pl.reciprocal(jnp.sum(p, axis=-1, keepdims=True), approx=True)

        head_outs.append(
            jnp.dot(p.astype(cdt), vh, preferred_element_type=jnp.float32))

    # Heads concatenated along the lane axis in-registers -> (T, C); no HBM round-trip.
    attn = jnp.concatenate(head_outs, axis=-1)

    # Fused output projection (Linear n_embd -> n_embd with bias), fp32 accumulate.
    out = jnp.dot(attn.astype(cdt), wproj_ref[...],
                  preferred_element_type=jnp.float32) + bproj_ref[...]
    out_ref[0] = out.astype(out_ref.dtype)


def multi_head_attention(x, wq, wk, wv, w_proj, b_proj,
                         *, compute_dtype=jnp.bfloat16):
    """x: (B, T, C); wq/wk/wv: (H, C, hs); w_proj: (C, C) (pre-transposed); b_proj: (1, C).

    compute_dtype is the MXU input dtype (bf16 recommended on v6e/v7x); all
    accumulation and the softmax stay in float32.
    """
    B, T, C = x.shape
    H, _, hs = wq.shape
    assert H * hs == C

    # Stack per-head weights -> (C, H*hs) blocks and concat Q/K/V -> (C, 3C).
    def stack(w):
        return jnp.transpose(w, (1, 0, 2)).reshape(C, H * hs)

    w_qkv = jnp.concatenate([stack(wq), stack(wk), stack(wv)], axis=1)

    x_c = x.astype(compute_dtype)
    w_qkv_c = w_qkv.astype(compute_dtype)
    w_proj_c = w_proj.astype(compute_dtype)
    b_proj_f32 = b_proj.astype(jnp.float32)

    kernel = functools.partial(
        mha_fused_kernel,
        num_heads=H,
        head_size=hs,
        scale=float(C) ** -0.5,   # scale by n_embd (C), exactly as in the reference module
    )

    return pl.pallas_call(
        kernel,
        out_shape=jax.ShapeDtypeStruct((B, T, C), jnp.float32),
        grid=(B,),
        in_specs=[
            pl.BlockSpec((1, T, C), lambda b: (b, 0, 0)),
            pl.BlockSpec((C, 3 * C), lambda b: (0, 0)),
            pl.BlockSpec((C, C), lambda b: (0, 0)),
            pl.BlockSpec((1, C), lambda b: (0, 0)),
        ],
        out_specs=pl.BlockSpec((1, T, C), lambda b: (b, 0, 0)),
        compiler_params=pltpu.CompilerParams(
            dimension_semantics=("parallel",)),
    )(x_c, w_qkv_c, w_proj_c, b_proj_f32)


if __name__ == "__main__":
    # Shapes consistent with the module: B=2, block_size T=8,
    # n_embd=32, num_heads=4, head_size=8 (num_heads * head_size == n_embd).
    B, T, C = 2, 8, 32
    H, hs = 4, 8

    key = jax.random.PRNGKey(0)
    kx, kq, kk, kv, kw, kb = jax.random.split(key, 6)

    x = jax.random.normal(kx, (B, T, C), dtype=jnp.float32)
    wq = 0.02 * jax.random.normal(kq, (H, C, hs), dtype=jnp.float32)
    wk = 0.02 * jax.random.normal(kk, (H, C, hs), dtype=jnp.float32)
    wv = 0.02 * jax.random.normal(kv, (H, C, hs), dtype=jnp.float32)
    w_proj = 0.02 * jax.random.normal(kw, (C, C), dtype=jnp.float32)
    b_proj = 0.02 * jax.random.normal(kb, (1, C), dtype=jnp.float32)

    # Pure-JAX reference (eval-mode semantics, fp32).
    def ref(x):
        q = jnp.einsum('btc,hcd->bhtd', x, wq)
        k = jnp.einsum('btc,hcd->bhtd', x, wk)
        v = jnp.einsum('btc,hcd->bhtd', x, wv)
        wei = jnp.einsum('bhtd,bhsd->bhts', q, k) * (C ** -0.5)
        mask = jnp.tril(jnp.ones((T, T), bool))
        wei = jnp.where(mask, wei, -jnp.inf)
        wei = jax.nn.softmax(wei, axis=-1)
        o = jnp.einsum('bhts,bhsd->bhtd', wei, v)
        o = jnp.transpose(o, (0, 2, 1, 3)).reshape(B, T, C)
        return o @ w_proj + b_proj

    expected = ref(x)

    # fp32 MXU path: tight check (approx reciprocal adds ~1e-4-level error at most here).
    out_f32 = multi_head_attention(x, wq, wk, wv, w_proj, b_proj,
                                   compute_dtype=jnp.float32)
    jax.block_until_ready(out_f32)
    assert jnp.allclose(out_f32, expected, atol=1e-3, rtol=1e-3)

    # bf16 MXU path (recommended on v6e/v7x): looser check consistent with bf16 inputs.
    out_bf16 = multi_head_attention(x, wq, wk, wv, w_proj, b_proj,
                                    compute_dtype=jnp.bfloat16)
    jax.block_until_ready(out_bf16)
    assert jnp.allclose(out_bf16, expected, atol=2e-2, rtol=2e-2)

    print("KERNEL_OK")
</pallas_src>

<mosaic_0001>
module attributes {stable_mosaic.version = 11 : i64} {
  func.func @mha_fused_kernel(%arg0: i32, %arg1: memref<1x8x32xf32, #tpu.memory_space<vmem>>, %arg2: memref<32x96xf32, #tpu.memory_space<vmem>>, %arg3: memref<32x32xf32, #tpu.memory_space<vmem>>, %arg4: memref<1x32xf32, #tpu.memory_space<vmem>>, %arg5: memref<1x8x32xf32, #tpu.memory_space<vmem>>) attributes {dimension_semantics = [#tpu.dimension_semantics<parallel>], iteration_bounds = array<i64: 2>, scalar_prefetch = 0 : i64, scratch_operands = 0 : i64, tpu.core_type = #tpu.core_type<tc>, window_params = [{transform_indices = @transform_0, window_bounds = array<i64: 1, 8, 32>}, {pipeline_mode = #tpu.pipeline_mode<synchronous>, transform_indices = @transform_1, window_bounds = array<i64: 32, 96>}, {pipeline_mode = #tpu.pipeline_mode<synchronous>, transform_indices = @transform_2, window_bounds = array<i64: 32, 32>}, {pipeline_mode = #tpu.pipeline_mode<synchronous>, transform_indices = @transform_3, window_bounds = array<i64: 1, 32>}, {transform_indices = @transform_4, window_bounds = array<i64: 1, 8, 32>}]} {
    %c0 = arith.constant 0 : index
    %c0_0 = arith.constant 0 : index
    %c0_1 = arith.constant 0 : index
    %0 = vector.load %arg1[%c0, %c0_0, %c0_1] : memref<1x8x32xf32, #tpu.memory_space<vmem>>, vector<1x8x32xf32>
    %1 = vector.shape_cast %0 : vector<1x8x32xf32> to vector<8x32xf32>
    %c0_2 = arith.constant 0 : index
    %c0_3 = arith.constant 0 : index
    %2 = vector.load %arg2[%c0_2, %c0_3] : memref<32x96xf32, #tpu.memory_space<vmem>>, vector<32x96xf32>
    %cst = arith.constant dense<0.000000e+00> : vector<8x96xf32>
    %3 = tpu.matmul %1, %2, %cst {dimension_numbers = #tpu.dot_dimension_numbers<[1], [0], [0], [1], [0, 0, 1, 1], [], []>} : vector<8x32xf32>, vector<32x96xf32>, vector<8x96xf32> -> vector<8x96xf32>
    %4 = vector.extract_strided_slice %3 {offsets = [0, 0], sizes = [8, 32], strides = [1, 1]} : vector<8x96xf32> to vector<8x32xf32>
    %cst_4 = arith.constant 0.176776692 : f32
    %5 = vector.broadcast %cst_4 : f32 to vector<8x32xf32>
    %6 = arith.mulf %4, %5 : vector<8x32xf32>
    %7 = vector.extract_strided_slice %3 {offsets = [0, 32], sizes = [8, 32], strides = [1, 1]} : vector<8x96xf32> to vector<8x32xf32>
    %8 = vector.extract_strided_slice %3 {offsets = [0, 64], sizes = [8, 32], strides = [1, 1]} : vector<8x96xf32> to vector<8x32xf32>
    %9 = tpu.iota {dimensions = array<i32: 0>} : vector<8x8xi32>
    %10 = tpu.iota {dimensions = array<i32: 1>} : vector<8x8xi32>
    %11 = arith.cmpi sle, %10, %9 : vector<8x8xi32>
    %cst_5 = arith.constant 0.000000e+00 : f32
    %cst_6 = arith.constant -1.000000e+30 : f32
    %12 = vector.broadcast %cst_5 : f32 to vector<8x8xf32>
    %13 = vector.broadcast %cst_6 : f32 to vector<8x8xf32>
    %14 = arith.select %11, %12, %13 : vector<8x8xi1>, vector<8x8xf32>
    %15 = vector.extract_strided_slice %6 {offsets = [0, 0], sizes = [8, 8], strides = [1, 1]} : vector<8x32xf32> to vector<8x8xf32>
    %16 = vector.extract_strided_slice %7 {offsets = [0, 0], sizes = [8, 8], strides = [1, 1]} : vector<8x32xf32> to vector<8x8xf32>
    %17 = vector.extract_strided_slice %8 {offsets = [0, 0], sizes = [8, 8], strides = [1, 1]} : vector<8x32xf32> to vector<8x8xf32>
    %cst_7 = arith.constant dense<0.000000e+00> : vector<8x8xf32>
    %18 = tpu.matmul %15, %16, %cst_7 {dimension_numbers = #tpu.dot_dimension_numbers<[1], [1], [0], [0], [0, 0, 1, 0], [], []>} : vector<8x8xf32>, vector<8x8xf32>, vector<8x8xf32> -> vector<8x8xf32>
    %19 = arith.addf %18, %14 : vector<8x8xf32>
    %cst_8 = arith.constant dense<0xFF800000> : vector<8xf32>
    %20 = vector.multi_reduction <maximumf>, %19, %cst_8 [1] : vector<8x8xf32> to vector<8xf32>
    %21 = vector.shape_cast %20 : vector<8xf32> to vector<8x1xf32>
    %22 = vector.broadcast %21 : vector<8x1xf32> to vector<8x8xf32>
    %23 = arith.subf %19, %22 : vector<8x8xf32>
    %24 = math.exp %23 : vector<8x8xf32>
    %cst_9 = arith.constant dense<0.000000e+00> : vector<8xf32>
    %25 = vector.multi_reduction <add>, %24, %cst_9 [1] : vector<8x8xf32> to vector<8xf32>
    %26 = vector.shape_cast %25 : vector<8xf32> to vector<8x1xf32>
    %27 = tpu.reciprocal %26 {approx = true} : vector<8x1xf32> -> vector<8x1xf32>
    %28 = vector.broadcast %27 : vector<8x1xf32> to vector<8x8xf32>
    %29 = arith.mulf %24, %28 : vector<8x8xf32>
    %cst_10 = arith.constant dense<0.000000e+00> : vector<8x8xf32>
    %30 = tpu.matmul %29, %17, %cst_10 {dimension_numbers = #tpu.dot_dimension_numbers<[1], [0], [0], [1], [0, 0, 1, 1], [], []>} : vector<8x8xf32>, vector<8x8xf32>, vector<8x8xf32> -> vector<8x8xf32>
    %31 = vector.extract_strided_slice %6 {offsets = [0, 8], sizes = [8, 8], strides = [1, 1]} : vector<8x32xf32> to vector<8x8xf32>
    %32 = vector.extract_strided_slice %7 {offsets = [0, 8], sizes = [8, 8], strides = [1, 1]} : vector<8x32xf32> to vector<8x8xf32>
    %33 = vector.extract_strided_slice %8 {offsets = [0, 8], sizes = [8, 8], strides = [1, 1]} : vector<8x32xf32> to vector<8x8xf32>
    %cst_11 = arith.constant dense<0.000000e+00> : vector<8x8xf32>
    %34 = tpu.matmul %31, %32, %cst_11 {dimension_numbers = #tpu.dot_dimension_numbers<[1], [1], [0], [0], [0, 0, 1, 0], [], []>} : vector<8x8xf32>, vector<8x8xf32>, vector<8x8xf32> -> vector<8x8xf32>
    %35 = arith.addf %34, %14 : vector<8x8xf32>
    %cst_12 = arith.constant dense<0xFF800000> : vector<8xf32>
    %36 = vector.multi_reduction <maximumf>, %35, %cst_12 [1] : vector<8x8xf32> to vector<8xf32>
    %37 = vector.shape_cast %36 : vector<8xf32> to vector<8x1xf32>
    %38 = vector.broadcast %37 : vector<8x1xf32> to vector<8x8xf32>
    %39 = arith.subf %35, %38 : vector<8x8xf32>
    %40 = math.exp %39 : vector<8x8xf32>
    %cst_13 = arith.constant dense<0.000000e+00> : vector<8xf32>
    %41 = vector.multi_reduction <add>, %40, %cst_13 [1] : vector<8x8xf32> to vector<8xf32>
    %42 = vector.shape_cast %41 : vector<8xf32> to vector<8x1xf32>
    %43 = tpu.reciprocal %42 {approx = true} : vector<8x1xf32> -> vector<8x1xf32>
    %44 = vector.broadcast %43 : vector<8x1xf32> to vector<8x8xf32>
    %45 = arith.mulf %40, %44 : vector<8x8xf32>
    %cst_14 = arith.constant dense<0.000000e+00> : vector<8x8xf32>
    %46 = tpu.matmul %45, %33, %cst_14 {dimension_numbers = #tpu.dot_dimension_numbers<[1], [0], [0], [1], [0, 0, 1, 1], [], []>} : vector<8x8xf32>, vector<8x8xf32>, vector<8x8xf32> -> vector<8x8xf32>
    %47 = vector.extract_strided_slice %6 {offsets = [0, 16], sizes = [8, 8], strides = [1, 1]} : vector<8x32xf32> to vector<8x8xf32>
    %48 = vector.extract_strided_slice %7 {offsets = [0, 16], sizes = [8, 8], strides = [1, 1]} : vector<8x32xf32> to vector<8x8xf32>
    %49 = vector.extract_strided_slice %8 {offsets = [0, 16], sizes = [8, 8], strides = [1, 1]} : vector<8x32xf32> to vector<8x8xf32>
    %cst_15 = arith.constant dense<0.000000e+00> : vector<8x8xf32>
    %50 = tpu.matmul %47, %48, %cst_15 {dimension_numbers = #tpu.dot_dimension_numbers<[1], [1], [0], [0], [0, 0, 1, 0], [], []>} : vector<8x8xf32>, vector<8x8xf32>, vector<8x8xf32> -> vector<8x8xf32>
    %51 = arith.addf %50, %14 : vector<8x8xf32>
    %cst_16 = arith.constant dense<0xFF800000> : vector<8xf32>
    %52 = vector.multi_reduction <maximumf>, %51, %cst_16 [1] : vector<8x8xf32> to vector<8xf32>
    %53 = vector.shape_cast %52 : vector<8xf32> to vector<8x1xf32>
    %54 = vector.broadcast %53 : vector<8x1xf32> to vector<8x8xf32>
    %55 = arith.subf %51, %54 : vector<8x8xf32>
    %56 = math.exp %55 : vector<8x8xf32>
    %cst_17 = arith.constant dense<0.000000e+00> : vector<8xf32>
    %57 = vector.multi_reduction <add>, %56, %cst_17 [1] : vector<8x8xf32> to vector<8xf32>
    %58 = vector.shape_cast %57 : vector<8xf32> to vector<8x1xf32>
    %59 = tpu.reciprocal %58 {approx = true} : vector<8x1xf32> -> vector<8x1xf32>
    %60 = vector.broadcast %59 : vector<8x1xf32> to vector<8x8xf32>
    %61 = arith.mulf %56, %60 : vector<8x8xf32>
    %cst_18 = arith.constant dense<0.000000e+00> : vector<8x8xf32>
    %62 = tpu.matmul %61, %49, %cst_18 {dimension_numbers = #tpu.dot_dimension_numbers<[1], [0], [0], [1], [0, 0, 1, 1], [], []>} : vector<8x8xf32>, vector<8x8xf32>, vector<8x8xf32> -> vector<8x8xf32>
    %63 = vector.extract_strided_slice %6 {offsets = [0, 24], sizes = [8, 8], strides = [1, 1]} : vector<8x32xf32> to vector<8x8xf32>
    %64 = vector.extract_strided_slice %7 {offsets = [0, 24], sizes = [8, 8], strides = [1, 1]} : vector<8x32xf32> to vector<8x8xf32>
    %65 = vector.extract_strided_slice %8 {offsets = [0, 24], sizes = [8, 8], strides = [1, 1]} : vector<8x32xf32> to vector<8x8xf32>
    %cst_19 = arith.constant dense<0.000000e+00> : vector<8x8xf32>
    %66 = tpu.matmul %63, %64, %cst_19 {dimension_numbers = #tpu.dot_dimension_numbers<[1], [1], [0], [0], [0, 0, 1, 0], [], []>} : vector<8x8xf32>, vector<8x8xf32>, vector<8x8xf32> -> vector<8x8xf32>
    %67 = arith.addf %66, %14 : vector<8x8xf32>
    %cst_20 = arith.constant dense<0xFF800000> : vector<8xf32>
    %68 = vector.multi_reduction <maximumf>, %67, %cst_20 [1] : vector<8x8xf32> to vector<8xf32>
    %69 = vector.shape_cast %68 : vector<8xf32> to vector<8x1xf32>
    %70 = vector.broadcast %69 : vector<8x1xf32> to vector<8x8xf32>
    %71 = arith.subf %67, %70 : vector<8x8xf32>
    %72 = math.exp %71 : vector<8x8xf32>
    %cst_21 = arith.constant dense<0.000000e+00> : vector<8xf32>
    %73 = vector.multi_reduction <add>, %72, %cst_21 [1] : vector<8x8xf32> to vector<8xf32>
    %74 = vector.shape_cast %73 : vector<8xf32> to vector<8x1xf32>
    %75 = tpu.reciprocal %74 {approx = true} : vector<8x1xf32> -> vector<8x1xf32>
    %76 = vector.broadcast %75 : vector<8x1xf32> to vector<8x8xf32>
    %77 = arith.mulf %72, %76 : vector<8x8xf32>
    %cst_22 = arith.constant dense<0.000000e+00> : vector<8x8xf32>
    %78 = tpu.matmul %77, %65, %cst_22 {dimension_numbers = #tpu.dot_dimension_numbers<[1], [0], [0], [1], [0, 0, 1, 1], [], []>} : vector<8x8xf32>, vector<8x8xf32>, vector<8x8xf32> -> vector<8x8xf32>
    %79 = tpu.concatenate %30, %46, %62, %78 in 1 : vector<8x8xf32>, vector<8x8xf32>, vector<8x8xf32>, vector<8x8xf32> -> vector<8x32xf32>
    %c0_23 = arith.constant 0 : index
    %c0_24 = arith.constant 0 : index
    %80 = vector.load %arg3[%c0_23, %c0_24] : memref<32x32xf32, #tpu.memory_space<vmem>>, vector<32x32xf32>
    %cst_25 = arith.constant dense<0.000000e+00> : vector<8x32xf32>
    %81 = tpu.matmul %79, %80, %cst_25 {dimension_numbers = #tpu.dot_dimension_numbers<[1], [0], [0], [1], [0, 0, 1, 1], [], []>} : vector<8x32xf32>, vector<32x32xf32>, vector<8x32xf32> -> vector<8x32xf32>
    %c0_26 = arith.constant 0 : index
    %c0_27 = arith.constant 0 : index
    %82 = vector.load %arg4[%c0_26, %c0_27] : memref<1x32xf32, #tpu.memory_space<vmem>>, vector<1x32xf32>
    %83 = vector.broadcast %82 : vector<1x32xf32> to vector<8x32xf32>
    %84 = arith.addf %81, %83 : vector<8x32xf32>
    %c0_28 = arith.constant 0 : index
    %c0_29 = arith.constant 0 : index
    %c0_30 = arith.constant 0 : index
    %85 = vector.load %arg5[%c0_28, %c0_29, %c0_30] : memref<1x8x32xf32, #tpu.memory_space<vmem>>, vector<1x8x32xf32>
    %86 = vector.shape_cast %85 : vector<1x8x32xf32> to vector<8x32xf32>
    %87 = vector.shape_cast %84 : vector<8x32xf32> to vector<1x8x32xf32>
    tpu.vector_store %arg5[%c0_28, %c0_29, %c0_30], %87 {strides = array<i32>} : memref<1x8x32xf32, #tpu.memory_space<vmem>>, vector<1x8x32xf32>,
    return
  }
  func.func @transform_0(%arg0: i32) -> (i32, i32, i32) {
    %c0_i32 = arith.constant 0 : i32
    %c0_i32_0 = arith.constant 0 : i32
    %c0_i32_1 = arith.constant 0 : i32
    return %arg0, %c0_i32, %c0_i32_0 : i32, i32, i32
  }
  func.func @transform_1(%arg0: i32) -> (i32, i32) {
    %c0_i32 = arith.constant 0 : i32
    %c0_i32_0 = arith.constant 0 : i32
    %c0_i32_1 = arith.constant 0 : i32
    return %c0_i32, %c0_i32_0 : i32, i32
  }
  func.func @transform_2(%arg0: i32) -> (i32, i32) {
    %c0_i32 = arith.constant 0 : i32
    %c0_i32_0 = arith.constant 0 : i32
    %c0_i32_1 = arith.constant 0 : i32
    return %c0_i32, %c0_i32_0 : i32, i32
  }
  func.func @transform_3(%arg0: i32) -> (i32, i32) {
    %c0_i32 = arith.constant 0 : i32
    %c0_i32_0 = arith.constant 0 : i32
    %c0_i32_1 = arith.constant 0 : i32
    return %c0_i32, %c0_i32_0 : i32, i32
  }
  func.func @transform_4(%arg0: i32) -> (i32, i32, i32) {
    %c0_i32 = arith.constant 0 : i32
    %c0_i32_0 = arith.constant 0 : i32
    %c0_i32_1 = arith.constant 0 : i32
    return %arg0, %c0_i32, %c0_i32_0 : i32, i32, i32
  }
}

</mosaic_0001>

<llo_original>
// kernel: tpu_custom_call.1
$region0: #{tpu_custom_call.1}
  #allocation0 [shape = 'u32[]', space=smem, size = 0x4, offset = 0x4, fixed_abs, tag = 'smem constant byte address 0x4 - core index']
  #allocation1 [shape = 'u32[72,128]{1,0:T(1,128)}', space=vmem, size = 0x9000, scoped, tag = 'internal scratch']
  %s0 = inlined_call_operand.hbm [shape: f32[2,8,32], index: 0, kind: input, shape index: {}]
  %s1 = inlined_call_operand.hbm [shape: f32[32,96], index: 1, kind: input, shape index: {}]
  %s2 = inlined_call_operand.hbm [shape: f32[32,32], index: 2, kind: input, shape index: {}]
  %s3 = inlined_call_operand.vmem [shape: f32[1,32], index: 3, kind: input, shape index: {}]
  %s4 = inlined_call_operand.hbm [shape: f32[2,8,32], index: 4, kind: output, shape index: {}]
  %s5 = sld [smem:[#allocation0]]
  $region61: #{tpu_custom_call.1} parent=0
    _
  %s7 = ssub.s32 1, %s5
  %s8 = scalar_select 0, %s7, %s5
  $region1: #{tpu_custom_call.1} parent=0
    #allocation2 [shape = 'u8[8192]{0}', space=vmem, size = 0x2000, scoped, tag = 'input window, operand 0']
    #allocation3 [shape = 's32[2]{0}', space=sflag, size = 0x8, scoped, tag = 'scoped memory for tpu_custom_call.1']
    #allocation4 [shape = 's32[2]{0}', space=sflag, size = 0x8, scoped, tag = 'scoped memory for tpu_custom_call.1']
    #allocation5 [shape = 'u8[16384]{0}', space=vmem, size = 0x4000, scoped, tag = 'input window, operand 1, single buffered']
    #allocation6 [shape = 's32[1]{0}', space=sflag, size = 0x4, scoped, tag = 'scoped memory for tpu_custom_call.1']
    #allocation7 [shape = 'u8[16384]{0}', space=vmem, size = 0x4000, scoped, tag = 'input window, operand 2, single buffered']
    #allocation8 [shape = 'u8[8192]{0}', space=vmem, size = 0x2000, scoped, tag = 'output window, operand 0']
    %9 = vsyncpa [#allocation3], 0
    %s10 = scalar_lea.sflag [#allocation3], 1
    %11 = vsyncpa %s10, 0
    %12 = vsyncpa [#allocation6], 0
    %13 = vsyncpa [#allocation4], 0
    %s14 = scalar_lea.sflag [#allocation4], 1
    %15 = vsyncpa %s14, 0
    loop: start=0, step=1, limit=4
    $region2: #{tpu_custom_call.1} parent=1 // loop_pre_header
      _
    $region3: #{tpu_custom_call.1} parent=1 // loop_header
      %s17 = sphi 0, %s21
      %p18 = scmp.ge.s32.totalorder %s17, 4
      %s27 = sphi 0, %s29
      %s30 = sphi 0, %s27
      %s31 = sphi 0, %s30
      %s47 = sphi 0, %s31
      %s51 = sphi 0, %s51
      %s53 = sphi 0, %s51
      %s54 = sphi 0, %s53
      %s68 = sphi 0, %s54
      %s72 = sphi 0, %s72
      %s74 = sphi 0, %s72
      %s75 = sphi 0, %s74
      %s89 = sphi 0, %s75
      %s93 = sphi 0, %s93
      %s95 = sphi 0, %s93
      %s96 = sphi 0, %s95
      %s110 = sphi 0, %s96
      %s116 = sphi 0, %s118
      %s119 = sphi 0, %s116
      %s120 = sphi 0, %s119
      %s136 = sphi 0, %s120
    $region4: #{tpu_custom_call.1} parent=1 // loop_header_branch
      %20 = sbr.rel (%p18) target = $region8
    $region5: #{tpu_custom_call.1} parent=1 // loop_body
      %s22 = ssub.s32 %s17, 1
      %s23 = ssub.s32 %s17, 2
      %s24 = sadd.s32 %s17, 1
      %s25 = ssub.s32 %s17, %s24
      %p26 = scmp.eq.s32.totalorder %s25, 0
      %s28 = sadd.s32 %s27, 1
      %s29 = scalar_select %p26, %s27, %s28
      %p32 = pneg %p26
      %p33 = scmp.eq.s32.totalorder %s17, 1
      %p34 = por %p32, %p33
      %p35 = scmp.ne.s32.totalorder %s27, %s30
      %p36 = scmp.eq.s32.totalorder %s17, 0
      %p37 = por %p35, %p36
      %p38 = scmp.ne.s32.totalorder %s27, %s30
      %p39 = scmp.eq.s32.totalorder %s22, 1
      %p40 = por %p38, %p39
      %p41 = scmp.ne.s32.totalorder %s30, %s31
      %p42 = scmp.eq.s32.totalorder %s22, 0
      %p43 = por %p41, %p42
      %p44 = scmp.ne.s32.totalorder %s30, %s31
      %p45 = scmp.eq.s32.totalorder %s23, 1
      %p46 = por %p44, %p45
      %p48 = scmp.ne.s32.totalorder %s31, %s47
      %p49 = scmp.eq.s32.totalorder %s23, 0
      %p50 = por %p48, %p49
      %s52 = sadd.s32 %s51, 1
      %p55 = scmp.eq.s32.totalorder %s17, 1
      %p56 = scmp.ne.s32.totalorder %s51, %s53
      %p57 = scmp.eq.s32.totalorder %s17, 0
      %p58 = por %p56, %p57
      %p59 = scmp.ne.s32.totalorder %s51, %s53
      %p60 = scmp.eq.s32.totalorder %s22, 1
      %p61 = por %p59, %p60
      %p62 = scmp.ne.s32.totalorder %s53, %s54
      %p63 = scmp.eq.s32.totalorder %s22, 0
      %p64 = por %p62, %p63
      %p65 = scmp.ne.s32.totalorder %s53, %s54
      %p66 = scmp.eq.s32.totalorder %s23, 1
      %p67 = por %p65, %p66
      %p69 = scmp.ne.s32.totalorder %s54, %s68
      %p70 = scmp.eq.s32.totalorder %s23, 0
      %p71 = por %p69, %p70
      %s73 = sadd.s32 %s72, 1
      %p76 = scmp.eq.s32.totalorder %s17, 1
      %p77 = scmp.ne.s32.totalorder %s72, %s74
      %p78 = scmp.eq.s32.totalorder %s17, 0
      %p79 = por %p77, %p78
      %p80 = scmp.ne.s32.totalorder %s72, %s74
      %p81 = scmp.eq.s32.totalorder %s22, 1
      %p82 = por %p80, %p81
      %p83 = scmp.ne.s32.totalorder %s74, %s75
      %p84 = scmp.eq.s32.totalorder %s22, 0
      %p85 = por %p83, %p84
      %p86 = scmp.ne.s32.totalorder %s74, %s75
      %p87 = scmp.eq.s32.totalorder %s23, 1
      %p88 = por %p86, %p87
      %p90 = scmp.ne.s32.totalorder %s75, %s89
      %p91 = scmp.eq.s32.totalorder %s23, 0
      %p92 = por %p90, %p91
      %s94 = sadd.s32 %s93, 1
      %p97 = scmp.eq.s32.totalorder %s17, 1
      %p98 = scmp.ne.s32.totalorder %s93, %s95
      %p99 = scmp.eq.s32.totalorder %s17, 0
      %p100 = por %p98, %p99
      %p101 = scmp.ne.s32.totalorder %s93, %s95
      %p102 = scmp.eq.s32.totalorder %s22, 1
      %p103 = por %p101, %p102
      %p104 = scmp.ne.s32.totalorder %s95, %s96
      %p105 = scmp.eq.s32.totalorder %s22, 0
      %p106 = por %p104, %p105
      %p107 = scmp.ne.s32.totalorder %s95, %s96
      %p108 = scmp.eq.s32.totalorder %s23, 1
      %p109 = por %p107, %p108
      %p111 = scmp.ne.s32.totalorder %s96, %s110
      %p112 = scmp.eq.s32.totalorder %s23, 0
      %p113 = por %p111, %p112
      %s114 = ssub.s32 %s17, %s24
      %p115 = scmp.eq.s32.totalorder %s114, 0
      %s117 = sadd.s32 %s116, 1
      %s118 = scalar_select %p115, %s116, %s117
      %p121 = pneg %p115
      %p122 = scmp.eq.s32.totalorder %s17, 1
      %p123 = por %p121, %p122
      %p124 = scmp.ne.s32.totalorder %s116, %s119
      %p125 = scmp.eq.s32.totalorder %s17, 0
      %p126 = por %p124, %p125
      %p127 = scmp.ne.s32.totalorder %s116, %s119
      %p128 = scmp.eq.s32.totalorder %s22, 1
      %p129 = por %p127, %p128
      %p130 = scmp.ne.s32.totalorder %s119, %s120
      %p131 = scmp.eq.s32.totalorder %s22, 0
      %p132 = por %p130, %p131
      %p133 = scmp.ne.s32.totalorder %s119, %s120
      %p134 = scmp.eq.s32.totalorder %s23, 1
      %p135 = por %p133, %p134
      %p137 = scmp.ne.s32.totalorder %s120, %s136
      %p138 = scmp.eq.s32.totalorder %s23, 0
      %p139 = por %p137, %p138
      %p140 = scmp.le.s32.totalorder 1, %s17
      %p141 = scmp.lt.s32.totalorder %s17, 3
      %p142 = pnand %p140, %p141
      %p143 = pneg %p142
      // Predicated region
      $region9: #{tpu_custom_call.1} parent=5 // pred_check
        _
      $region10: #{tpu_custom_call.1} parent=5 // pred_check_branch
        %145 = sbr.rel (%p142) target = $region12
      $region11: #{tpu_custom_call.1} parent=5 // pred_region
        %s146 = ssub.s32 %s17, 1
        // Predicated region
        $region13: #{tpu_custom_call.1} parent=11 // pred_check
          %p147 = pneg %p64
        $region14: #{tpu_custom_call.1} parent=11 // pred_check_branch
          %149 = sbr.rel (%p147) target = $region16
        $region15: #{tpu_custom_call.1} parent=11 // pred_region
          %151 = vsyncadd [#allocation6], 0
          %s152 = sshll.u32 %s1, 4
          %s153 = int_to_ptr.hbm [resolvable:$true] %s152
          %s154 = sshll.u32 [#allocation5], 4
          %s155 = int_to_ptr.vmem [resolvable:$true] %s154
          %160 = dma.hbm_to_vmem [thread:$0]  %s153, 512, %s155, [#allocation6], 128, 128, 8
        $region16: #{tpu_custom_call.1} parent=11 // pred_fallthru
          _
        // Predicated region
        $region17: #{tpu_custom_call.1} parent=11 // pred_check
          %p161 = pneg %p85
        $region18: #{tpu_custom_call.1} parent=11 // pred_check_branch
          %163 = sbr.rel (%p161) target = $region20
        $region19: #{tpu_custom_call.1} parent=11 // pred_region
          %165 = vsyncadd [#allocation6], 0
          %s166 = sshll.u32 %s2, 4
          %s167 = int_to_ptr.hbm [resolvable:$true] %s166
          %s168 = sshll.u32 [#allocation7], 4
          %s169 = int_to_ptr.vmem [resolvable:$true] %s168
          %174 = dma.hbm_to_vmem [thread:$0]  %s167, 512, %s169, [#allocation6], 128, 128, 8
        $region20: #{tpu_custom_call.1} parent=11 // pred_fallthru
          _
        // Predicated region
        $region21: #{tpu_custom_call.1} parent=11 // pred_check
          %p175 = pneg %p106
        $region22: #{tpu_custom_call.1} parent=11 // pred_check_branch
          %177 = sbr.rel (%p175) target = $region24
        $region23: #{tpu_custom_call.1} parent=11 // pred_region
          _
        $region24: #{tpu_custom_call.1} parent=11 // pred_fallthru
          _
      $region12: #{tpu_custom_call.1} parent=5 // pred_fallthru
        _
      %p178 = scmp.lt.s32.totalorder %s17, 2
      // Predicated region
      $region25: #{tpu_custom_call.1} parent=5 // pred_check
        %p179 = pneg %p178
      $region26: #{tpu_custom_call.1} parent=5 // pred_check_branch
        %181 = sbr.rel (%p179) target = $region28
      $region27: #{tpu_custom_call.1} parent=5 // pred_region
        // Predicated region
        $region29: #{tpu_custom_call.1} parent=27 // pred_check
          %p182 = pneg %p37
        $region30: #{tpu_custom_call.1} parent=27 // pred_check_branch
          %184 = sbr.rel (%p182) target = $region32
        $region31: #{tpu_custom_call.1} parent=27 // pred_region
          %s185 = sand.u32 %s27, 1
          %s186 = scalar_lea.sflag [#allocation3], %s185
          %s187 = sand.u32 %s27, 1
          %s188 = smul.addr %s187, 8
          %s189 = scalar_lea.vmem [#allocation2], %s188
          %191 = vsyncadd %s186, 0
          %s192 = smul.addr %s17, 8
          %s193 = scalar_lea.hbm %s0, %s192
          %s195 = sshll.u32 %s193, 4
          %s196 = int_to_ptr.hbm [resolvable:$true] %s195
          %s197 = sshll.u32 %s189, 4
          %s198 = int_to_ptr.vmem [resolvable:$true] %s197
          %200 = dma.hbm_to_vmem [thread:$0]  %s196, 128, %s198, %s186
        $region32: #{tpu_custom_call.1} parent=27 // pred_fallthru
          _
      $region28: #{tpu_custom_call.1} parent=5 // pred_fallthru
        _
      %p201 = scmp.le.s32.totalorder 1, %s17
      %p202 = scmp.lt.s32.totalorder %s17, 3
      %p203 = pnand %p201, %p202
      %p204 = pneg %p203
      // Predicated region
      $region33: #{tpu_custom_call.1} parent=5 // pred_check
        _
      $region34: #{tpu_custom_call.1} parent=5 // pred_check_branch
        %206 = sbr.rel (%p203) target = $region36
      $region35: #{tpu_custom_call.1} parent=5 // pred_region
        %s207 = ssub.s32 %s17, 1
        %s208 = sand.u32 %s30, 1
        %s209 = scalar_lea.sflag [#allocation3], %s208
        %s210 = sand.u32 %s30, 1
        %s211 = smul.addr %s210, 8
        %s212 = scalar_lea.vmem [#allocation2], %s211
        // Predicated region
        $region37: #{tpu_custom_call.1} parent=35 // pred_check
          %p213 = pneg %p43
        $region38: #{tpu_custom_call.1} parent=35 // pred_check_branch
          %215 = sbr.rel (%p213) target = $region40
        $region39: #{tpu_custom_call.1} parent=35 // pred_region
          %217 = dma.done %s209, 128
        $region40: #{tpu_custom_call.1} parent=35 // pred_fallthru
          _
        // Predicated region
        $region41: #{tpu_custom_call.1} parent=35 // pred_check
          %p218 = pneg %p64
        $region42: #{tpu_custom_call.1} parent=35 // pred_check_branch
          %220 = sbr.rel (%p218) target = $region44
        $region43: #{tpu_custom_call.1} parent=35 // pred_region
          %222 = dma.done [#allocation6], 512
        $region44: #{tpu_custom_call.1} parent=35 // pred_fallthru
          _
        // Predicated region
        $region45: #{tpu_custom_call.1} parent=35 // pred_check
          %p223 = pneg %p85
        $region46: #{tpu_custom_call.1} parent=35 // pred_check_branch
          %225 = sbr.rel (%p223) target = $region48
        $region47: #{tpu_custom_call.1} parent=35 // pred_region
          %227 = dma.done [#allocation6], 512
        $region48: #{tpu_custom_call.1} parent=35 // pred_fallthru
          _
        %s228 = sand.u32 %s30, 1
        %s229 = scalar_lea.sflag [#allocation3], %s228
        %s230 = sand.u32 %s30, 1
        %s231 = smul.addr %s230, 8
        %s232 = scalar_lea.vmem [#allocation2], %s231
        %p233 = pneg %p43
        %p234 = pneg %p40
        %p235 = pneg %p64
        %p236 = pneg %p61
        %p237 = pneg %p85
        %p238 = pneg %p82
        %p239 = pneg %p106
        %p240 = pneg %p103
        %p241 = pneg %p132
        %p242 = pneg %p129
        %s243 = sand.u32 %s119, 1
        %s244 = scalar_lea.sflag [#allocation4], %s243
        %s245 = sand.u32 %s119, 1
        %s246 = smul.addr %s245, 8
        %s247 = scalar_lea.vmem [#allocation8], %s246
        %v248 = vld [vmem:[%s212] sm:$0xff]
        %v249 = vld [vmem:[#allocation5] sm:$0xff]
        %v250 = vld [vmem:[#allocation5 + $0x8] sm:$0xff]
        %v251 = vld [vmem:[#allocation5 + $0x10] sm:$0xff]
        %v252 = vld [vmem:[#allocation5 + $0x18] sm:$0xff]
        %vm253 = vcmask 261120
        %v255 = vsel %vm253, %v248, 0
        %257 = vmatpush.msra.mxu0 0.0
        %258 = vmatpush.msra.mxu0 0.0
        %259 = vmatpush.msra.mxu0 0.0
        %260 = vmatpush.msra.mxu0 0.0
        %261 = vmatpush.msra.mxu0 0.0
        %262 = vmatpush.msra.mxu0 0.0
        %263 = vmatpush.msra.mxu0 0.0
        %264 = vmatpush.msra.mxu0 0.0
        %265 = vmatpush.msra.mxu0 0.0
        %266 = vmatpush.msra.mxu0 0.0
        %267 = vmatpush.msra.mxu0 0.0
        %268 = vmatpush.msra.mxu0 0.0
        %269 = vmatpush.msra.mxu0 %v252
        %270 = vmatpush.msra.mxu0 %v251
        %271 = vmatpush.msra.mxu0 %v250
        %272 = vmatpush.msra.mxu0 %v249
        %273 = vmatmul.f32.gmra.mxu0 %v255
        %v274 = vpop.f32.mrf.mxu0
        %v275 = vadd.f32 0.0, %v274
        %276 = vdwg.mxu0
        %v277 = vmul.f32 %v275, 0.17677669
        %v278 = vlaneseq
        %v279 = vshrl.u32 %v278, 7
        %v280 = vlaneseq
        %v281 = vand.u32 %v280, 127
        %vm282 = vcmp.le.s32.totalorder %v281, %v279
        %v283 = vsel %vm282, 0.0, -1e+30
        %285 = vrot.lane.b32.xlu0 %v275, 96
        %v286 = vpop.permute.xlu0 %285
        %vm287 = vcmask 64512
        %v289 = vsel %vm287, %v277, 0
        %v291 = vsel %vm287, %v286, 0
        %293 = vmatpush.xpose.msra.mxu0 0.0
        %294 = vmatpush.xpose.msra.mxu0 0.0
        %295 = vmatpush.xpose.msra.mxu0 0.0
        %296 = vmatpush.xpose.msra.mxu0 0.0
        %297 = vmatpush.xpose.msra.mxu0 0.0
        %298 = vmatpush.xpose.msra.mxu0 0.0
        %299 = vmatpush.xpose.msra.mxu0 0.0
        %300 = vmatpush.xpose.msra.mxu0 0.0
        %301 = vmatpush.xpose.msra.mxu0 0.0
        %302 = vmatpush.xpose.msra.mxu0 0.0
        %303 = vmatpush.xpose.msra.mxu0 0.0
        %304 = vmatpush.xpose.msra.mxu0 0.0
        %305 = vmatpush.xpose.msra.mxu0 0.0
        %306 = vmatpush.xpose.msra.mxu0 0.0
        %307 = vmatpush.xpose.msra.mxu0 0.0
        %308 = vmatpush.xpose.msra.mxu0 %v291
        %309 = vmatmul.f32.gmra.mxu0 %v289
        %v310 = vpop.f32.mrf.mxu0
        %v311 = vadd.f32 %v283, %v310
        %312 = vdwg.mxu0
        %v313 = vsel %vm287, %v311, -inf
        %314 = vmax.xlane.f32.xlu0 %v313
        %v315 = vpop.xlane.xlu0 %314
        %v316 = vsub.f32 %v311, %v315
        %v317 = vmul.f32 %v316, 1.442695
        %v318 = vpow.pop %v317
        %v319 = vsel %vm287, %v318, 0.0
        %320 = vadd.xlane.f32.xlu0 %v319
        %v321 = vpop.xlane.xlu0 %320
        %v322 = vrcp.pop %v321
        %v323 = vmul.f32 %v318, %v322
        %324 = vrot.lane.b32.xlu0 %v275, 64
        %v325 = vpop.permute.xlu0 %324
        %v328 = vsel %vm287, %v323, 0
        %330 = vmatpush.msra.mxu0 0.0
        %331 = vmatpush.msra.mxu0 0.0
        %332 = vmatpush.msra.mxu0 0.0
        %333 = vmatpush.msra.mxu0 0.0
        %334 = vmatpush.msra.mxu0 0.0
        %335 = vmatpush.msra.mxu0 0.0
        %336 = vmatpush.msra.mxu0 0.0
        %337 = vmatpush.msra.mxu0 0.0
        %338 = vmatpush.msra.mxu0 0.0
        %339 = vmatpush.msra.mxu0 0.0
        %340 = vmatpush.msra.mxu0 0.0
        %341 = vmatpush.msra.mxu0 0.0
        %342 = vmatpush.msra.mxu0 0.0
        %343 = vmatpush.msra.mxu0 0.0
        %344 = vmatpush.msra.mxu0 0.0
        %345 = vmatpush.msra.mxu0 %v325
        %346 = vmatmul.f32.gmra.mxu0 %v328
        %v347 = vpop.f32.mrf.mxu0
        %v348 = vadd.f32 0.0, %v347
        %349 = vdwg.mxu0
        %350 = vrot.lane.b32.xlu0 %v277, 120
        %v351 = vpop.permute.xlu0 %350
        %352 = vrot.lane.b32.xlu0 %v275, 88
        %v353 = vpop.permute.xlu0 %352
        %v354 = vsel %vm287, %v351, 0
        %v356 = vsel %vm287, %v353, 0
        %358 = vmatpush.xpose.msra.mxu0 0.0
        %359 = vmatpush.xpose.msra.mxu0 0.0
        %360 = vmatpush.xpose.msra.mxu0 0.0
        %361 = vmatpush.xpose.msra.mxu0 0.0
        %362 = vmatpush.xpose.msra.mxu0 0.0
        %363 = vmatpush.xpose.msra.mxu0 0.0
        %364 = vmatpush.xpose.msra.mxu0 0.0
        %365 = vmatpush.xpose.msra.mxu0 0.0
        %366 = vmatpush.xpose.msra.mxu0 0.0
        %367 = vmatpush.xpose.msra.mxu0 0.0
        %368 = vmatpush.xpose.msra.mxu0 0.0
        %369 = vmatpush.xpose.msra.mxu0 0.0
        %370 = vmatpush.xpose.msra.mxu0 0.0
        %371 = vmatpush.xpose.msra.mxu0 0.0
        %372 = vmatpush.xpose.msra.mxu0 0.0
        %373 = vmatpush.xpose.msra.mxu0 %v356
        %374 = vmatmul.f32.gmra.mxu0 %v354
        %v375 = vpop.f32.mrf.mxu0
        %v376 = vadd.f32 %v283, %v375
        %377 = vdwg.mxu0
        %v378 = vsel %vm287, %v376, -inf
        %379 = vmax.xlane.f32.xlu0 %v378
        %v380 = vpop.xlane.xlu0 %379
        %v381 = vsub.f32 %v376, %v380
        %v382 = vmul.f32 %v381, 1.442695
        %v383 = vpow.pop %v382
        %v384 = vsel %vm287, %v383, 0.0
        %385 = vadd.xlane.f32.xlu0 %v384
        %v386 = vpop.xlane.xlu0 %385
        %v387 = vrcp.pop %v386
        %v388 = vmul.f32 %v383, %v387
        %389 = vrot.lane.b32.xlu0 %v275, 56
        %v390 = vpop.permute.xlu0 %389
        %v393 = vsel %vm287, %v388, 0
        %395 = vmatpush.msra.mxu0 0.0
        %396 = vmatpush.msra.mxu0 0.0
        %397 = vmatpush.msra.mxu0 0.0
        %398 = vmatpush.msra.mxu0 0.0
        %399 = vmatpush.msra.mxu0 0.0
        %400 = vmatpush.msra.mxu0 0.0
        %401 = vmatpush.msra.mxu0 0.0
        %402 = vmatpush.msra.mxu0 0.0
        %403 = vmatpush.msra.mxu0 0.0
        %404 = vmatpush.msra.mxu0 0.0
        %405 = vmatpush.msra.mxu0 0.0
        %406 = vmatpush.msra.mxu0 0.0
        %407 = vmatpush.msra.mxu0 0.0
        %408 = vmatpush.msra.mxu0 0.0
        %409 = vmatpush.msra.mxu0 0.0
        %410 = vmatpush.msra.mxu0 %v390
        %411 = vmatmul.f32.gmra.mxu0 %v393
        %v412 = vpop.f32.mrf.mxu0
        %v413 = vadd.f32 0.0, %v412
        %414 = vdwg.mxu0
        %415 = vrot.lane.b32.xlu0 %v277, 112
        %v416 = vpop.permute.xlu0 %415
        %417 = vrot.lane.b32.xlu0 %v275, 80
        %v418 = vpop.permute.xlu0 %417
        %v419 = vsel %vm287, %v416, 0
        %v421 = vsel %vm287, %v418, 0
        %423 = vmatpush.xpose.msra.mxu0 0.0
        %424 = vmatpush.xpose.msra.mxu0 0.0
        %425 = vmatpush.xpose.msra.mxu0 0.0
        %426 = vmatpush.xpose.msra.mxu0 0.0
        %427 = vmatpush.xpose.msra.mxu0 0.0
        %428 = vmatpush.xpose.msra.mxu0 0.0
        %429 = vmatpush.xpose.msra.mxu0 0.0
        %430 = vmatpush.xpose.msra.mxu0 0.0
        %431 = vmatpush.xpose.msra.mxu0 0.0
        %432 = vmatpush.xpose.msra.mxu0 0.0
        %433 = vmatpush.xpose.msra.mxu0 0.0
        %434 = vmatpush.xpose.msra.mxu0 0.0
        %435 = vmatpush.xpose.msra.mxu0 0.0
        %436 = vmatpush.xpose.msra.mxu0 0.0
        %437 = vmatpush.xpose.msra.mxu0 0.0
        %438 = vmatpush.xpose.msra.mxu0 %v421
        %439 = vmatmul.f32.gmra.mxu0 %v419
        %v440 = vpop.f32.mrf.mxu0
        %v441 = vadd.f32 %v283, %v440
        %442 = vdwg.mxu0
        %v443 = vsel %vm287, %v441, -inf
        %444 = vmax.xlane.f32.xlu0 %v443
        %v445 = vpop.xlane.xlu0 %444
        %v446 = vsub.f32 %v441, %v445
        %v447 = vmul.f32 %v446, 1.442695
        %v448 = vpow.pop %v447
        %v449 = vsel %vm287, %v448, 0.0
        %450 = vadd.xlane.f32.xlu0 %v449
        %v451 = vpop.xlane.xlu0 %450
        %v452 = vrcp.pop %v451
        %v453 = vmul.f32 %v448, %v452
        %454 = vrot.lane.b32.xlu0 %v275, 48
        %v455 = vpop.permute.xlu0 %454
        %v458 = vsel %vm287, %v453, 0
        %460 = vmatpush.msra.mxu0 0.0
        %461 = vmatpush.msra.mxu0 0.0
        %462 = vmatpush.msra.mxu0 0.0
        %463 = vmatpush.msra.mxu0 0.0
        %464 = vmatpush.msra.mxu0 0.0
        %465 = vmatpush.msra.mxu0 0.0
        %466 = vmatpush.msra.mxu0 0.0
        %467 = vmatpush.msra.mxu0 0.0
        %468 = vmatpush.msra.mxu0 0.0
        %469 = vmatpush.msra.mxu0 0.0
        %470 = vmatpush.msra.mxu0 0.0
        %471 = vmatpush.msra.mxu0 0.0
        %472 = vmatpush.msra.mxu0 0.0
        %473 = vmatpush.msra.mxu0 0.0
        %474 = vmatpush.msra.mxu0 0.0
        %475 = vmatpush.msra.mxu0 %v455
        %476 = vmatmul.f32.gmra.mxu0 %v458
        %v477 = vpop.f32.mrf.mxu0
        %v478 = vadd.f32 0.0, %v477
        %479 = vdwg.mxu0
        %480 = vrot.lane.b32.xlu0 %v277, 104
        %v481 = vpop.permute.xlu0 %480
        %482 = vrot.lane.b32.xlu0 %v275, 72
        %v483 = vpop.permute.xlu0 %482
        %v484 = vsel %vm287, %v481, 0
        %v486 = vsel %vm287, %v483, 0
        %488 = vmatpush.xpose.msra.mxu0 0.0
        %489 = vmatpush.xpose.msra.mxu0 0.0
        %490 = vmatpush.xpose.msra.mxu0 0.0
        %491 = vmatpush.xpose.msra.mxu0 0.0
        %492 = vmatpush.xpose.msra.mxu0 0.0
        %493 = vmatpush.xpose.msra.mxu0 0.0
        %494 = vmatpush.xpose.msra.mxu0 0.0
        %495 = vmatpush.xpose.msra.mxu0 0.0
        %496 = vmatpush.xpose.msra.mxu0 0.0
        %497 = vmatpush.xpose.msra.mxu0 0.0
        %498 = vmatpush.xpose.msra.mxu0 0.0
        %499 = vmatpush.xpose.msra.mxu0 0.0
        %500 = vmatpush.xpose.msra.mxu0 0.0
        %501 = vmatpush.xpose.msra.mxu0 0.0
        %502 = vmatpush.xpose.msra.mxu0 0.0
        %503 = vmatpush.xpose.msra.mxu0 %v486
        %504 = vmatmul.f32.gmra.mxu0 %v484
        %v505 = vpop.f32.mrf.mxu0
        %v506 = vadd.f32 %v283, %v505
        %507 = vdwg.mxu0
        %v508 = vsel %vm287, %v506, -inf
        %509 = vmax.xlane.f32.xlu0 %v508
        %v510 = vpop.xlane.xlu0 %509
        %v511 = vsub.f32 %v506, %v510
        %v512 = vmul.f32 %v511, 1.442695
        %v513 = vpow.pop %v512
        %v514 = vsel %vm287, %v513, 0.0
        %515 = vadd.xlane.f32.xlu0 %v514
        %v516 = vpop.xlane.xlu0 %515
        %v517 = vrcp.pop %v516
        %v518 = vmul.f32 %v513, %v517
        %519 = vrot.lane.b32.xlu0 %v275, 40
        %v520 = vpop.permute.xlu0 %519
        %v523 = vsel %vm287, %v518, 0
        %525 = vmatpush.msra.mxu0 0.0
        %526 = vmatpush.msra.mxu0 0.0
        %527 = vmatpush.msra.mxu0 0.0
        %528 = vmatpush.msra.mxu0 0.0
        %529 = vmatpush.msra.mxu0 0.0
        %530 = vmatpush.msra.mxu0 0.0
        %531 = vmatpush.msra.mxu0 0.0
        %532 = vmatpush.msra.mxu0 0.0
        %533 = vmatpush.msra.mxu0 0.0
        %534 = vmatpush.msra.mxu0 0.0
        %535 = vmatpush.msra.mxu0 0.0
        %536 = vmatpush.msra.mxu0 0.0
        %537 = vmatpush.msra.mxu0 0.0
        %538 = vmatpush.msra.mxu0 0.0
        %539 = vmatpush.msra.mxu0 0.0
        %540 = vmatpush.msra.mxu0 %v520
        %541 = vmatmul.f32.gmra.mxu0 %v523
        %v542 = vpop.f32.mrf.mxu0
        %v543 = vadd.f32 0.0, %v542
        %544 = vdwg.mxu0
        %546 = vrot.lane.b32.xlu0 %v413, 8
        %v547 = vpop.permute.xlu0 %546
        %550 = vrot.lane.b32.xlu0 %v478, 16
        %v551 = vpop.permute.xlu0 %550
        %554 = vrot.lane.b32.xlu0 %v543, 24
        %v555 = vpop.permute.xlu0 %554
        %v557 = vsel %vm287, %v348, %v547
        %vm558 = vcmask 130048
        %v559 = vsel %vm558, %v557, %v551
        %vm560 = vcmask 195584
        %v561 = vsel %vm560, %v559, %v555
        %v562 = vld [vmem:[#allocation7] sm:$0xff]
        %v563 = vld [vmem:[#allocation7 + $0x8] sm:$0xff]
        %v564 = vld [vmem:[#allocation7 + $0x10] sm:$0xff]
        %v565 = vld [vmem:[#allocation7 + $0x18] sm:$0xff]
        %v566 = vld [vmem:[%s3] sm:$0x1]
        %v568 = vperm.slane %v566, 0
        %v571 = vsel %vm253, %v561, 0
        %573 = vmatpush.msra.mxu0 0.0
        %574 = vmatpush.msra.mxu0 0.0
        %575 = vmatpush.msra.mxu0 0.0
        %576 = vmatpush.msra.mxu0 0.0
        %577 = vmatpush.msra.mxu0 0.0
        %578 = vmatpush.msra.mxu0 0.0
        %579 = vmatpush.msra.mxu0 0.0
        %580 = vmatpush.msra.mxu0 0.0
        %581 = vmatpush.msra.mxu0 0.0
        %582 = vmatpush.msra.mxu0 0.0
        %583 = vmatpush.msra.mxu0 0.0
        %584 = vmatpush.msra.mxu0 0.0
        %585 = vmatpush.msra.mxu0 %v565
        %586 = vmatpush.msra.mxu0 %v564
        %587 = vmatpush.msra.mxu0 %v563
        %588 = vmatpush.msra.mxu0 %v562
        %589 = vmatmul.f32.gmra.mxu0 %v571
        %v590 = vpop.f32.mrf.mxu0
        %v591 = vadd.f32 %v568, %v590
        %592 = vdwg.mxu0
        %593 = vst.msk [vmem:[%s247] sm:$0xff] %vm253, %v591
        %s594 = sand.u32 %s119, 1
        %s595 = scalar_lea.sflag [#allocation4], %s594
        %s596 = sand.u32 %s119, 1
        %s597 = smul.addr %s596, 8
        %s598 = scalar_lea.vmem [#allocation8], %s597
        // Predicated region
        $region49: #{tpu_custom_call.1} parent=35 // pred_check
          %p599 = pneg %p129
        $region50: #{tpu_custom_call.1} parent=35 // pred_check_branch
          %601 = sbr.rel (%p599) target = $region52
        $region51: #{tpu_custom_call.1} parent=35 // pred_region
          %603 = vsyncadd %s595, 0
          %s604 = smul.addr %s22, 8
          %s605 = scalar_lea.hbm %s4, %s604
          %s607 = sshll.u32 %s598, 4
          %s608 = int_to_ptr.vmem [resolvable:$true] %s607
          %s609 = sshll.u32 %s605, 4
          %s610 = int_to_ptr.hbm [resolvable:$true] %s609
          %612 = dma.vmem_to_hbm [thread:$0]  %s608, 128, %s610, %s595
        $region52: #{tpu_custom_call.1} parent=35 // pred_fallthru
          _
      $region36: #{tpu_custom_call.1} parent=5 // pred_fallthru
        _
      %p613 = scmp.le.s32.totalorder 2, %s17
      // Predicated region
      $region53: #{tpu_custom_call.1} parent=5 // pred_check
        %p614 = pneg %p613
      $region54: #{tpu_custom_call.1} parent=5 // pred_check_branch
        %616 = sbr.rel (%p614) target = $region56
      $region55: #{tpu_custom_call.1} parent=5 // pred_region
        %s617 = ssub.s32 %s17, 2
        // Predicated region
        $region57: #{tpu_custom_call.1} parent=55 // pred_check
          %p618 = pneg %p135
        $region58: #{tpu_custom_call.1} parent=55 // pred_check_branch
          %620 = sbr.rel (%p618) target = $region60
        $region59: #{tpu_custom_call.1} parent=55 // pred_region
          %s621 = sand.u32 %s120, 1
          %s622 = scalar_lea.sflag [#allocation4], %s621
          %s623 = sand.u32 %s120, 1
          %s624 = smul.addr %s623, 8
          %s625 = scalar_lea.vmem [#allocation8], %s624
          %627 = dma.done %s622, 128
        $region60: #{tpu_custom_call.1} parent=55 // pred_fallthru
          _
      $region56: #{tpu_custom_call.1} parent=5 // pred_fallthru
        _
    $region6: #{tpu_custom_call.1} parent=1 // loop_footer
      %s21 = sadd.s32 1, %s17
    $region7: #{tpu_custom_call.1} parent=1 // loop_footer_branch
      %16 = sbr.rel target = $region3
    $region8: #{tpu_custom_call.1} parent=1 // loop_exit
      _
    %628 = vsyncpa [#allocation3], 1
    %s629 = scalar_lea.sflag [#allocation3], 1
    %630 = vsyncpa %s629, 1
    %631 = vsyncpa [#allocation6], 1
    %632 = vsyncpa [#allocation4], 1
    %s633 = scalar_lea.sflag [#allocation4], 1
    %634 = vsyncpa %s633, 1

</llo_original>
